<compile_context>
chip_gen: v5e
topology: v5e:2x2
jax: 0.10.0
libtpu: 0.0.40
codegen_flags: <defaults>
</compile_context>

<pallas_src>
import jax
import jax.numpy as jnp
from jax.experimental import pallas as pl
from jax.experimental.pallas import tpu as pltpu


_TARGET_TILE_BYTES = 2 * 1024 * 1024  # ~2 MiB per buffer: double-buffered in+out
                                      # (~8 MiB resident) fits every generation's
                                      # scoped VMEM with plenty of headroom.


def _normalize_kernel(shift_ref, inv_scale_ref, x_ref, o_ref):
    # shift_ref / inv_scale_ref: VMEM f32[R, 1] per-row constants
    # x_ref / o_ref:             VMEM [R, Kb] lane-dense tiles
    x = x_ref[...].astype(jnp.float32)
    # (x - b) / s  ==  x * (1/s) + (-b/s)   -- one VPU mul + add, no EUP divide.
    o_ref[...] = (x * inv_scale_ref[...] + shift_ref[...]).astype(o_ref.dtype)


def _choose_blocks(rows, cols, itemsize):
    """Pick (row_block, col_block) honoring TPU (8, 128) tiling rules."""
    # Column block: full width unless even an 8-row slab would blow the tile
    # budget and the width splits cleanly into multiples of 128.
    kb = cols
    if 8 * cols * itemsize > _TARGET_TILE_BYTES and cols % 128 == 0:
        max_k = max(128, (_TARGET_TILE_BYTES // (8 * itemsize)) // 128 * 128)
        for cand in range(min(cols, max_k), 127, -128):
            if cols % cand == 0:
                kb = cand
                break
    # Row block: as many rows as fit the budget, multiple of 8 (sublane), <= rows.
    r = max(8, (_TARGET_TILE_BYTES // (kb * itemsize)) // 8 * 8)
    if rows > 8:
        # Keep >= 2 grid steps along the parallel row axis so v7x's two
        # TensorCores both get work.
        r = min(r, max(8, (rows // 2) // 8 * 8))
    r = min(r, rows)
    if r != rows and r % 8 != 0:
        r = rows  # fall back to the full extent (always legal)
    return r, kb


def data_normalize(x, bias, scale):
    """(x - bias[None,:,None,None]) / scale[None,:,None,None] on NCHW x."""
    N, C, H, W = x.shape
    bias = jnp.asarray(bias, dtype=jnp.float32).reshape(-1)
    scale = jnp.asarray(scale, dtype=jnp.float32).reshape(-1)
    if bias.shape[0] == 1:   # scalar bias/scale case of the PyTorch module
        bias = jnp.broadcast_to(bias, (C,))
    if scale.shape[0] == 1:
        scale = jnp.broadcast_to(scale, (C,))
    assert bias.shape == (C,) and scale.shape == (C,)

    rows, cols = N * C, H * W
    itemsize = jnp.dtype(x.dtype).itemsize

    # Lane-dense 2D view (free reshape for row-major NCHW).
    x2 = x.reshape(rows, cols)

    # Precompute per-row constants once:  out = x * inv_scale + shift.
    inv_scale = 1.0 / scale
    shift = -bias * inv_scale
    inv_scale_rows = jnp.tile(inv_scale, (N,)).reshape(rows, 1)
    shift_rows = jnp.tile(shift, (N,)).reshape(rows, 1)

    r, kb = _choose_blocks(rows, cols, itemsize)
    grid = (pl.cdiv(rows, r), pl.cdiv(cols, kb))

    cost = pl.CostEstimate(
        flops=2 * rows * cols,           # one mul + one add per element
        transcendentals=0,
        bytes_accessed=2 * rows * cols * itemsize,  # read x + write out
    )

    out2 = pl.pallas_call(
        _normalize_kernel,
        out_shape=jax.ShapeDtypeStruct((rows, cols), x.dtype),
        grid_spec=pl.GridSpec(
            grid=grid,
            in_specs=[
                pl.BlockSpec((r, 1), lambda i, j: (i, 0)),    # shift
                pl.BlockSpec((r, 1), lambda i, j: (i, 0)),    # inv_scale
                pl.BlockSpec((r, kb), lambda i, j: (i, j)),   # x tile
            ],
            out_specs=pl.BlockSpec((r, kb), lambda i, j: (i, j)),
        ),
        compiler_params=pltpu.CompilerParams(
            dimension_semantics=("parallel", "parallel"),
            vmem_limit_bytes=32 * 1024 * 1024,  # headroom incl. v5e's 16 MiB default
        ),
        cost_estimate=cost,
    )(shift_rows, inv_scale_rows, x2)

    return out2.reshape(N, C, H, W)


if __name__ == "__main__":
    key = jax.random.PRNGKey(0)
    N, C, H, W = 2, 4, 16, 16
    x = jax.random.normal(key, (N, C, H, W), dtype=jnp.float32)

    # Per-channel normalization parameters (C = 4), mirroring
    # DataNormalizeLayer(bias=[...], scale=[...]).
    bias = (0.485, 0.456, 0.406, 0.5)
    scale = (0.229, 0.224, 0.225, 0.25)

    out = data_normalize(x, bias, scale)
    out = jax.block_until_ready(out)

    # Reference check in plain JAX (exact torch semantics: subtract then divide).
    b = jnp.asarray(bias, jnp.float32).reshape(1, -1, 1, 1)
    s = jnp.asarray(scale, jnp.float32).reshape(1, -1, 1, 1)
    ref = (x - b) / s
    assert jnp.allclose(out, ref, atol=1e-5, rtol=1e-5), "mismatch vs reference"

    print("KERNEL_OK")
</pallas_src>

<mosaic_0001>
module attributes {stable_mosaic.version = 11 : i64} {
  func.func @_normalize_kernel(%arg0: i32, %arg1: i32, %arg2: memref<8x1xf32, #tpu.memory_space<vmem>>, %arg3: memref<8x1xf32, #tpu.memory_space<vmem>>, %arg4: memref<8x256xf32, #tpu.memory_space<vmem>>, %arg5: memref<8x256xf32, #tpu.memory_space<vmem>>) attributes {dimension_semantics = [#tpu.dimension_semantics<parallel>, #tpu.dimension_semantics<parallel>], iteration_bounds = array<i64: 1, 1>, scalar_prefetch = 0 : i64, scratch_operands = 0 : i64, tpu.core_type = #tpu.core_type<tc>, window_params = [{transform_indices = @transform_0, window_bounds = array<i64: 8, 1>}, {transform_indices = @transform_1, window_bounds = array<i64: 8, 1>}, {transform_indices = @transform_2, window_bounds = array<i64: 8, 256>}, {transform_indices = @transform_3, window_bounds = array<i64: 8, 256>}]} {
    %c0 = arith.constant 0 : index
    %c0_0 = arith.constant 0 : index
    %0 = vector.load %arg4[%c0, %c0_0] : memref<8x256xf32, #tpu.memory_space<vmem>>, vector<8x256xf32>
    %c0_1 = arith.constant 0 : index
    %c0_2 = arith.constant 0 : index
    %1 = vector.load %arg3[%c0_1, %c0_2] : memref<8x1xf32, #tpu.memory_space<vmem>>, vector<8x1xf32>
    %2 = vector.broadcast %1 : vector<8x1xf32> to vector<8x256xf32>
    %3 = arith.mulf %0, %2 : vector<8x256xf32>
    %c0_3 = arith.constant 0 : index
    %c0_4 = arith.constant 0 : index
    %4 = vector.load %arg2[%c0_3, %c0_4] : memref<8x1xf32, #tpu.memory_space<vmem>>, vector<8x1xf32>
    %5 = vector.broadcast %4 : vector<8x1xf32> to vector<8x256xf32>
    %6 = arith.addf %3, %5 : vector<8x256xf32>
    %c0_5 = arith.constant 0 : index
    %c0_6 = arith.constant 0 : index
    %7 = vector.load %arg5[%c0_5, %c0_6] : memref<8x256xf32, #tpu.memory_space<vmem>>, vector<8x256xf32>
    tpu.vector_store %arg5[%c0_5, %c0_6], %6 {strides = array<i32>} : memref<8x256xf32, #tpu.memory_space<vmem>>, vector<8x256xf32>,
    return
  }
  func.func @transform_0(%arg0: i32, %arg1: i32) -> (i32, i32) {
    %c0_i32 = arith.constant 0 : i32
    %c0_i32_0 = arith.constant 0 : i32
    return %arg0, %c0_i32 : i32, i32
  }
  func.func @transform_1(%arg0: i32, %arg1: i32) -> (i32, i32) {
    %c0_i32 = arith.constant 0 : i32
    %c0_i32_0 = arith.constant 0 : i32
    return %arg0, %c0_i32 : i32, i32
  }
  func.func @transform_2(%arg0: i32, %arg1: i32) -> (i32, i32) {
    %c0_i32 = arith.constant 0 : i32
    return %arg0, %arg1 : i32, i32
  }
  func.func @transform_3(%arg0: i32, %arg1: i32) -> (i32, i32) {
    %c0_i32 = arith.constant 0 : i32
    return %arg0, %arg1 : i32, i32
  }
}

</mosaic_0001>

<llo_original>
// kernel: tpu_custom_call.1
$region0: #{tpu_custom_call.1}
  #allocation0 [shape = 'u32[]', space=smem, size = 0x4, offset = 0x4, fixed_abs, tag = 'smem constant byte address 0x4 - core index']
  #allocation1 [shape = 'u32[72,128]{1,0:T(1,128)}', space=vmem, size = 0x9000, scoped, tag = 'internal scratch']
  %s0 = inlined_call_operand.vmem [shape: f32[8,1], index: 0, kind: input, shape index: {}]
  %s1 = inlined_call_operand.vmem [shape: f32[8,1], index: 1, kind: input, shape index: {}]
  %s2 = inlined_call_operand.vmem [shape: f32[8,256], index: 2, kind: input, shape index: {}]
  %s3 = inlined_call_operand.hbm [shape: f32[8,256], index: 3, kind: output, shape index: {}]
  %s4 = sld [smem:[#allocation0]]
  $region22: #{tpu_custom_call.1} parent=0
    _
  %s6 = ssub.s32 1, %s4
  %s7 = scalar_select 0, %s6, %s4
  $region1: #{tpu_custom_call.1} parent=0
    #allocation2 [shape = 'u8[8192]{0}', space=vmem, size = 0x2000, scoped, tag = 'output window, operand 0, single buffered']
    #allocation3 [shape = 's32[1]{0}', space=sflag, size = 0x4, scoped, tag = 'scoped memory for tpu_custom_call.1']
    %8 = vsyncpa [#allocation3], 0
    // Predicated region
    $region2: #{tpu_custom_call.1} parent=1 // pred_check
      _
    $region3: #{tpu_custom_call.1} parent=1 // pred_check_branch
      %10 = sbr.rel (0) target = $region5
    $region4: #{tpu_custom_call.1} parent=1 // pred_region
      _
    $region5: #{tpu_custom_call.1} parent=1 // pred_fallthru
      _
    // Predicated region
    $region6: #{tpu_custom_call.1} parent=1 // pred_check
      _
    $region7: #{tpu_custom_call.1} parent=1 // pred_check_branch
      %12 = sbr.rel (0) target = $region9
    $region8: #{tpu_custom_call.1} parent=1 // pred_region
      _
    $region9: #{tpu_custom_call.1} parent=1 // pred_fallthru
      _
    // Predicated region
    $region10: #{tpu_custom_call.1} parent=1 // pred_check
      _
    $region11: #{tpu_custom_call.1} parent=1 // pred_check_branch
      %14 = sbr.rel (0) target = $region13
    $region12: #{tpu_custom_call.1} parent=1 // pred_region
      _
    $region13: #{tpu_custom_call.1} parent=1 // pred_fallthru
      _
    %v15 = vld [vmem:[%s2] sm:$0xff]
    %v16 = vld [vmem:[%s2 + $0x8] sm:$0xff]
    %v17 = vld [vmem:[%s1] sm:$0xff]
    %19 = vset.pattern.permute.xlu0 0
    %20 = vperm.xlu0 %19, %v17
    %v21 = vpop.permute.xlu0 %20
    %v23 = vmul.f32 %v15, %v21
    %v24 = vmul.f32 %v16, %v21
    %v25 = vld [vmem:[%s0] sm:$0xff]
    %27 = vset.pattern.permute.xlu0 0
    %28 = vperm.xlu0 %27, %v25
    %v29 = vpop.permute.xlu0 %28
    %v31 = vadd.f32 %v23, %v29
    %v32 = vadd.f32 %v24, %v29
    %33 = vst [vmem:[#allocation2] sm:$0xff] %v31
    %34 = vst [vmem:[#allocation2 + $0x8] sm:$0xff] %v32
    // Predicated region
    $region14: #{tpu_custom_call.1} parent=1 // pred_check
      _
    $region15: #{tpu_custom_call.1} parent=1 // pred_check_branch
      %36 = sbr.rel (0) target = $region17
    $region16: #{tpu_custom_call.1} parent=1 // pred_region
      %38 = vsyncadd [#allocation3], 0
      %s40 = sshll.u32 [#allocation2], 4
      %s41 = int_to_ptr.vmem [resolvable:$true] %s40
      %s42 = sshll.u32 %s3, 4
      %s43 = int_to_ptr.hbm [resolvable:$true] %s42
      %45 = dma.vmem_to_hbm [thread:$0]  %s41, 256, %s43, [#allocation3]
    $region17: #{tpu_custom_call.1} parent=1 // pred_fallthru
      _
    // Predicated region
    $region18: #{tpu_custom_call.1} parent=1 // pred_check
      _
    $region19: #{tpu_custom_call.1} parent=1 // pred_check_branch
      %47 = sbr.rel (0) target = $region21
    $region20: #{tpu_custom_call.1} parent=1 // pred_region
      %49 = dma.done [#allocation3], 256
    $region21: #{tpu_custom_call.1} parent=1 // pred_fallthru
      _
    %50 = vsyncpa [#allocation3], 1

</llo_original>
